<compile_context>
chip_gen: v6e
topology: v6e:2x2x1
jax: 0.10.0
libtpu: 0.0.40
codegen_flags: <defaults>
</compile_context>

<pallas_src>
import functools

import jax
import jax.numpy as jnp
from jax.experimental import pallas as pl
from jax.experimental.pallas import tpu as pltpu


def _round_up(x, m):
    return ((x + m - 1) // m) * m


# ---------------------------------------------------------------------------
# Tiled linear:  y = x @ W^T + b   (PyTorch nn.Linear weight layout (out, in))
# ---------------------------------------------------------------------------
def _linear_kernel(x_ref, w_ref, b_ref, o_ref):
    # x_ref: (tm, Kp)  w_ref: (Kp, Np)  b_ref: (1, Np)  o_ref: (tm, Np)
    acc = jnp.dot(x_ref[...], w_ref[...], preferred_element_type=jnp.float32)
    o_ref[...] = (acc + b_ref[...]).astype(o_ref.dtype)


def linear_pallas(x2d, weight, bias, *, tm_max=256):
    """x2d: (M, K).  weight: (Nout, K).  bias: (Nout,).  Returns (M, Nout)."""
    M, K = x2d.shape
    Nout = weight.shape[0]

    Kp = _round_up(K, 128)             # lane-aligned contraction dim
    Np = _round_up(Nout, 128)          # lane-dense output -> unmasked stores
    tm = min(tm_max, _round_up(M, 8))  # sublane-aligned M tile
    Mp = _round_up(M, tm)

    x_p = jnp.pad(x2d, ((0, Mp - M), (0, Kp - K)))
    w_p = jnp.pad(weight.T, ((0, Kp - K), (0, Np - Nout)))
    b_p = jnp.pad(bias, (0, Np - Nout)).reshape(1, Np)

    out = pl.pallas_call(
        _linear_kernel,
        out_shape=jax.ShapeDtypeStruct((Mp, Np), x2d.dtype),
        grid_spec=pltpu.PrefetchScalarGridSpec(
            num_scalar_prefetch=0,
            grid=(Mp // tm,),
            in_specs=[
                pl.BlockSpec((tm, Kp), lambda i: (i, 0)),   # activations stream
                pl.BlockSpec((Kp, Np), lambda i: (0, 0)),   # weight stays resident
                pl.BlockSpec((1, Np), lambda i: (0, 0)),    # bias stays resident
            ],
            out_specs=pl.BlockSpec((tm, Np), lambda i: (i, 0)),
        ),
        compiler_params=pltpu.CompilerParams(
            dimension_semantics=("parallel",),
            vmem_limit_bytes=32 * 1024 * 1024,
        ),
    )(x_p, w_p, b_p)
    return out[:M, :Nout]


# ---------------------------------------------------------------------------
# Attention core: softmax(q k^T * scale) @ v, a block of (batch*head) pairs
# per grid step.
# ---------------------------------------------------------------------------
def _attn_core_kernel(q_ref, k_ref, v_ref, o_ref, *, scale, s_valid):
    # q/k/v_ref, o_ref: (bh, Sp, Dp)
    q = q_ref[...] * jnp.asarray(scale, dtype=q_ref.dtype)
    k = k_ref[...]
    v = v_ref[...]
    # Batched q @ k^T over the (padded) head dim (zero-padded lanes are inert).
    s = jnp.einsum('bqd,bkd->bqk', q, k, preferred_element_type=jnp.float32)
    if s_valid is not None:
        # Mask padded key positions before the softmax.
        kv_idx = jax.lax.broadcasted_iota(jnp.int32, s.shape, 2)
        s = jnp.where(kv_idx < s_valid, s, -1e30)
    m = jnp.max(s, axis=-1, keepdims=True)
    p = jnp.exp(s - m)
    l = jnp.sum(p, axis=-1, keepdims=True)
    o = jnp.einsum('bqk,bkd->bqd', p.astype(v.dtype), v,
                   preferred_element_type=jnp.float32)
    o_ref[...] = (o / l).astype(o_ref.dtype)


def _choose_bh_block(BH, Sp, Dp, itemsize, *, cap=16,
                     budget=20 * 1024 * 1024):
    """Largest divisor of BH (<= cap) whose tiles + f32 temps fit the budget."""
    best = 1
    for d in range(1, min(cap, BH) + 1):
        if BH % d != 0:
            continue
        tiles = 2 * 4 * d * Sp * Dp * itemsize          # double-buffered q,k,v,o
        temps = d * Sp * _round_up(Sp, 128) * 4          # f32 scores
        temps += d * Sp * Dp * 4                         # f32 accumulator
        if tiles + temps <= budget:
            best = d
    return best


def mha_core(q, k, v, scale):
    """q, k, v: (B, H, S, Dh) -> softmax(qk^T*scale)v, shape (B, H, S, Dh)."""
    B, H, S, Dh = q.shape
    BH = B * H
    Sp = _round_up(S, 8)        # sublane-aligned sequence length
    Dp = _round_up(Dh, 128)     # lane-dense head dim

    def pad(t):
        t = t.reshape(BH, S, Dh)
        return jnp.pad(t, ((0, 0), (0, Sp - S), (0, Dp - Dh)))

    qp, kp, vp = pad(q), pad(k), pad(v)
    bh = _choose_bh_block(BH, Sp, Dp, qp.dtype.itemsize)

    kernel = functools.partial(
        _attn_core_kernel, scale=scale, s_valid=(S if Sp != S else None))
    out = pl.pallas_call(
        kernel,
        out_shape=jax.ShapeDtypeStruct((BH, Sp, Dp), q.dtype),
        grid_spec=pltpu.PrefetchScalarGridSpec(
            num_scalar_prefetch=0,
            grid=(BH // bh,),
            in_specs=[
                pl.BlockSpec((bh, Sp, Dp), lambda i: (i, 0, 0)),
                pl.BlockSpec((bh, Sp, Dp), lambda i: (i, 0, 0)),
                pl.BlockSpec((bh, Sp, Dp), lambda i: (i, 0, 0)),
            ],
            out_specs=pl.BlockSpec((bh, Sp, Dp), lambda i: (i, 0, 0)),
        ),
        compiler_params=pltpu.CompilerParams(
            dimension_semantics=("parallel",),
            vmem_limit_bytes=32 * 1024 * 1024,
        ),
    )(qp, kp, vp)
    return out[:, :S, :Dh].reshape(B, H, S, Dh)


# ---------------------------------------------------------------------------
# Full Attention.forward
# ---------------------------------------------------------------------------
def attention_forward(x, w_qkv, b_qkv, w_proj, b_proj, n_heads):
    """x: (B, N, D).  Weights in PyTorch nn.Linear layout (out, in)."""
    B, N, D = x.shape
    head_dim = D // n_heads
    scale = head_dim ** (-0.5)

    # qkv projection on the collapsed (B*N, D) token axis.
    qkv = linear_pallas(x.reshape(B * N, D), w_qkv, b_qkv)          # (B*N, 3D)
    qkv = qkv.reshape(B, N, 3, n_heads, head_dim)
    qkv = qkv.transpose(2, 0, 3, 1, 4)                              # (3, B, H, N, Dh)
    q, k, v = qkv[0], qkv[1], qkv[2]

    # TODO(synk): attn_drop / proj_drop are identity because the module
    # defaults attn_p = proj_p = 0; dropout masks are not implemented.
    attn = mha_core(q, k, v, scale)                                 # (B, H, N, Dh)

    # merge heads and apply output projection.
    attn = attn.transpose(0, 2, 1, 3).reshape(B * N, D)
    out = linear_pallas(attn, w_proj, b_proj)                       # (B*N, D)
    return out.reshape(B, N, D)


# ---------------------------------------------------------------------------
# Plain-JAX reference (transcription of the PyTorch forward)
# ---------------------------------------------------------------------------
def attention_ref(x, w_qkv, b_qkv, w_proj, b_proj, n_heads):
    B, N, D = x.shape
    hd = D // n_heads
    scale = hd ** (-0.5)
    qkv = x @ w_qkv.T + b_qkv
    qkv = qkv.reshape(B, N, 3, n_heads, hd).transpose(2, 0, 3, 1, 4)
    q, k, v = qkv[0], qkv[1], qkv[2]
    s = (q @ jnp.swapaxes(k, -2, -1)) * scale
    p = jax.nn.softmax(s, axis=-1)
    o = (p @ v).transpose(0, 2, 1, 3).reshape(B, N, D)
    return o @ w_proj.T + b_proj


if __name__ == "__main__":
    # Small shapes consistent with the module: batch=2, tokens=8, dim=32, heads=4.
    B, N, D, H = 2, 8, 32, 4

    key = jax.random.PRNGKey(0)
    kx, kqw, kqb, kpw, kpb = jax.random.split(key, 5)
    x = jax.random.uniform(kx, (B, N, D), dtype=jnp.float32)
    w_qkv = jax.random.normal(kqw, (3 * D, D), dtype=jnp.float32) * 0.02
    b_qkv = jax.random.normal(kqb, (3 * D,), dtype=jnp.float32) * 0.02
    w_proj = jax.random.normal(kpw, (D, D), dtype=jnp.float32) * 0.02
    b_proj = jax.random.normal(kpb, (D,), dtype=jnp.float32) * 0.02

    out = attention_forward(x, w_qkv, b_qkv, w_proj, b_proj, H)
    out = jax.block_until_ready(out)
    assert out.shape == (B, N, D), out.shape

    ref = attention_ref(x, w_qkv, b_qkv, w_proj, b_proj, H)
    max_err = float(jnp.max(jnp.abs(out - ref)))
    assert jnp.allclose(out, ref, atol=1e-3, rtol=1e-3), max_err

    print("KERNEL_OK")
</pallas_src>

<mosaic_0001>
module attributes {stable_mosaic.version = 11 : i64} {
  func.func @_linear_kernel(%arg0: i32, %arg1: memref<16x128xf32, #tpu.memory_space<vmem>>, %arg2: memref<128x128xf32, #tpu.memory_space<vmem>>, %arg3: memref<1x128xf32, #tpu.memory_space<vmem>>, %arg4: memref<16x128xf32, #tpu.memory_space<vmem>>) attributes {dimension_semantics = [#tpu.dimension_semantics<parallel>], iteration_bounds = array<i64: 1>, scalar_prefetch = 0 : i64, scratch_operands = 0 : i64, tpu.core_type = #tpu.core_type<tc>, window_params = [{transform_indices = @transform_0, window_bounds = array<i64: 16, 128>}, {pipeline_mode = #tpu.pipeline_mode<synchronous>, transform_indices = @transform_1, window_bounds = array<i64: 128, 128>}, {pipeline_mode = #tpu.pipeline_mode<synchronous>, transform_indices = @transform_2, window_bounds = array<i64: 1, 128>}, {transform_indices = @transform_3, window_bounds = array<i64: 16, 128>}]} {
    %c0 = arith.constant 0 : index
    %c0_0 = arith.constant 0 : index
    %0 = vector.load %arg1[%c0, %c0_0] : memref<16x128xf32, #tpu.memory_space<vmem>>, vector<16x128xf32>
    %c0_1 = arith.constant 0 : index
    %c0_2 = arith.constant 0 : index
    %1 = vector.load %arg2[%c0_1, %c0_2] : memref<128x128xf32, #tpu.memory_space<vmem>>, vector<128x128xf32>
    %cst = arith.constant dense<0.000000e+00> : vector<16x128xf32>
    %2 = tpu.matmul %0, %1, %cst {dimension_numbers = #tpu.dot_dimension_numbers<[1], [0], [0], [1], [0, 0, 1, 1], [], []>} : vector<16x128xf32>, vector<128x128xf32>, vector<16x128xf32> -> vector<16x128xf32>
    %c0_3 = arith.constant 0 : index
    %c0_4 = arith.constant 0 : index
    %3 = vector.load %arg3[%c0_3, %c0_4] : memref<1x128xf32, #tpu.memory_space<vmem>>, vector<1x128xf32>
    %4 = vector.broadcast %3 : vector<1x128xf32> to vector<16x128xf32>
    %5 = arith.addf %2, %4 : vector<16x128xf32>
    %c0_5 = arith.constant 0 : index
    %c0_6 = arith.constant 0 : index
    %6 = vector.load %arg4[%c0_5, %c0_6] : memref<16x128xf32, #tpu.memory_space<vmem>>, vector<16x128xf32>
    tpu.vector_store %arg4[%c0_5, %c0_6], %5 {strides = array<i32>} : memref<16x128xf32, #tpu.memory_space<vmem>>, vector<16x128xf32>,
    return
  }
  func.func @transform_0(%arg0: i32) -> (i32, i32) {
    %c0_i32 = arith.constant 0 : i32
    %c0_i32_0 = arith.constant 0 : i32
    return %arg0, %c0_i32 : i32, i32
  }
  func.func @transform_1(%arg0: i32) -> (i32, i32) {
    %c0_i32 = arith.constant 0 : i32
    %c0_i32_0 = arith.constant 0 : i32
    %c0_i32_1 = arith.constant 0 : i32
    return %c0_i32, %c0_i32_0 : i32, i32
  }
  func.func @transform_2(%arg0: i32) -> (i32, i32) {
    %c0_i32 = arith.constant 0 : i32
    %c0_i32_0 = arith.constant 0 : i32
    %c0_i32_1 = arith.constant 0 : i32
    return %c0_i32, %c0_i32_0 : i32, i32
  }
  func.func @transform_3(%arg0: i32) -> (i32, i32) {
    %c0_i32 = arith.constant 0 : i32
    %c0_i32_0 = arith.constant 0 : i32
    return %arg0, %c0_i32 : i32, i32
  }
}

</mosaic_0001>

<llo_original>
// kernel: tpu_custom_call.1
$region0: #{tpu_custom_call.1}
  #allocation0 [shape = 'u32[]', space=smem, size = 0x4, offset = 0x4, fixed_abs, tag = 'smem constant byte address 0x4 - core index']
  #allocation1 [shape = 'u32[144,128]{1,0:T(1,128)}', space=vmem, size = 0x12000, scoped, tag = 'internal scratch']
  %s0 = inlined_call_operand.hbm [shape: f32[16,128], index: 0, kind: input, shape index: {}]
  %s1 = inlined_call_operand.hbm [shape: f32[128,128], index: 1, kind: input, shape index: {}]
  %s2 = inlined_call_operand.vmem [shape: f32[1,128], index: 2, kind: input, shape index: {}]
  %s3 = inlined_call_operand.hbm [shape: f32[16,128], index: 3, kind: output, shape index: {}]
  %s4 = sld [smem:[#allocation0]]
  $region30: #{tpu_custom_call.1} parent=0
    _
  %s6 = ssub.s32 1, %s4
  %s7 = scalar_select 0, %s6, %s4
  $region1: #{tpu_custom_call.1} parent=0
    #allocation2 [shape = 'u8[8192]{0}', space=vmem, size = 0x2000, scoped, tag = 'input window, operand 0, single buffered']
    #allocation3 [shape = 's32[1]{0}', space=sflag, size = 0x4, scoped, tag = 'scoped memory for tpu_custom_call.1']
    #allocation4 [shape = 's32[1]{0}', space=sflag, size = 0x4, scoped, tag = 'scoped memory for tpu_custom_call.1']
    #allocation5 [shape = 'u8[65536]{0}', space=vmem, size = 0x10000, scoped, tag = 'input window, operand 1, single buffered']
    #allocation6 [shape = 's32[1]{0}', space=sflag, size = 0x4, scoped, tag = 'scoped memory for tpu_custom_call.1']
    #allocation7 [shape = 'u8[8192]{0}', space=vmem, size = 0x2000, scoped, tag = 'output window, operand 0, single buffered']
    %8 = vsyncpa [#allocation3], 0
    %9 = vsyncpa [#allocation6], 0
    %10 = vsyncpa [#allocation4], 0
    // Predicated region
    $region2: #{tpu_custom_call.1} parent=1 // pred_check
      _
    $region3: #{tpu_custom_call.1} parent=1 // pred_check_branch
      %12 = sbr.rel (0) target = $region5
    $region4: #{tpu_custom_call.1} parent=1 // pred_region
      %s14 = ssub.s32 256, 256
      %15 = vsyncadd [#allocation3], %s14
      %s16 = sshll.u32 [#allocation2], 4
      %s17 = int_to_ptr.vmem [resolvable:$true] %s16
      %22 = dma.hbm_to_vmem [thread:$0]  %s0, 256, %s17, [#allocation3], 128, 128, 8
    $region5: #{tpu_custom_call.1} parent=1 // pred_fallthru
      _
    // Predicated region
    $region6: #{tpu_custom_call.1} parent=1 // pred_check
      _
    $region7: #{tpu_custom_call.1} parent=1 // pred_check_branch
      %24 = sbr.rel (0) target = $region9
    $region8: #{tpu_custom_call.1} parent=1 // pred_region
      %s26 = ssub.s32 2048, 2048
      %27 = vsyncadd [#allocation6], %s26
      %s28 = sshll.u32 [#allocation5], 4
      %s29 = int_to_ptr.vmem [resolvable:$true] %s28
      %34 = dma.hbm_to_vmem [thread:$0]  %s1, 2048, %s29, [#allocation6], 128, 128, 8
    $region9: #{tpu_custom_call.1} parent=1 // pred_fallthru
      _
    // Predicated region
    $region10: #{tpu_custom_call.1} parent=1 // pred_check
      _
    $region11: #{tpu_custom_call.1} parent=1 // pred_check_branch
      %36 = sbr.rel (0) target = $region13
    $region12: #{tpu_custom_call.1} parent=1 // pred_region
      _
    $region13: #{tpu_custom_call.1} parent=1 // pred_fallthru
      _
    // Predicated region
    $region14: #{tpu_custom_call.1} parent=1 // pred_check
      _
    $region15: #{tpu_custom_call.1} parent=1 // pred_check_branch
      %38 = sbr.rel (0) target = $region17
    $region16: #{tpu_custom_call.1} parent=1 // pred_region
      %39 = dma.done [#allocation3], 256
    $region17: #{tpu_custom_call.1} parent=1 // pred_fallthru
      _
    // Predicated region
    $region18: #{tpu_custom_call.1} parent=1 // pred_check
      _
    $region19: #{tpu_custom_call.1} parent=1 // pred_check_branch
      %41 = sbr.rel (0) target = $region21
    $region20: #{tpu_custom_call.1} parent=1 // pred_region
      %42 = dma.done [#allocation6], 2048
    $region21: #{tpu_custom_call.1} parent=1 // pred_fallthru
      _
    %v43 = vld [vmem:[#allocation2] sm:$0xff]
    %v44 = vld [vmem:[#allocation2 + $0x8] sm:$0xff]
    %v45 = vld [vmem:[#allocation5] sm:$0xff]
    %v46 = vld [vmem:[#allocation5 + $0x8] sm:$0xff]
    %v47 = vld [vmem:[#allocation5 + $0x10] sm:$0xff]
    %v48 = vld [vmem:[#allocation5 + $0x18] sm:$0xff]
    %v49 = vld [vmem:[#allocation5 + $0x20] sm:$0xff]
    %v50 = vld [vmem:[#allocation5 + $0x28] sm:$0xff]
    %v51 = vld [vmem:[#allocation5 + $0x30] sm:$0xff]
    %v52 = vld [vmem:[#allocation5 + $0x38] sm:$0xff]
    %v53 = vld [vmem:[#allocation5 + $0x40] sm:$0xff]
    %v54 = vld [vmem:[#allocation5 + $0x48] sm:$0xff]
    %v55 = vld [vmem:[#allocation5 + $0x50] sm:$0xff]
    %v56 = vld [vmem:[#allocation5 + $0x58] sm:$0xff]
    %v57 = vld [vmem:[#allocation5 + $0x60] sm:$0xff]
    %v58 = vld [vmem:[#allocation5 + $0x68] sm:$0xff]
    %v59 = vld [vmem:[#allocation5 + $0x70] sm:$0xff]
    %v60 = vld [vmem:[#allocation5 + $0x78] sm:$0xff]
    %v61 = vld [vmem:[%s2] sm:$0x1]
    %v63 = vlaneseq
    %v64 = vshrl.u32 %v63, 7
    %v65 = vsub.s32 0, %v64
    %v66 = vrot.slane %v61, %v65
    %68 = vmatprep.subr.mxu0 0.0
    %69 = vmatpush1.msra.mxu0 %v60
    %70 = vmatprep.subr.mxu0 0.0
    %71 = vmatpush1.msra.mxu0 %v59
    %72 = vmatprep.subr.mxu0 0.0
    %73 = vmatpush1.msra.mxu0 %v58
    %74 = vmatprep.subr.mxu0 0.0
    %75 = vmatpush1.msra.mxu0 %v57
    %76 = vmatprep.subr.mxu0 0.0
    %77 = vmatpush1.msra.mxu0 %v56
    %78 = vmatprep.subr.mxu0 0.0
    %79 = vmatpush1.msra.mxu0 %v55
    %80 = vmatprep.subr.mxu0 0.0
    %81 = vmatpush1.msra.mxu0 %v54
    %82 = vmatprep.subr.mxu0 0.0
    %83 = vmatpush1.msra.mxu0 %v53
    %84 = vmatprep.subr.mxu0 0.0
    %85 = vmatpush1.msra.mxu0 %v52
    %86 = vmatprep.subr.mxu0 0.0
    %87 = vmatpush1.msra.mxu0 %v51
    %88 = vmatprep.subr.mxu0 0.0
    %89 = vmatpush1.msra.mxu0 %v50
    %90 = vmatprep.subr.mxu0 0.0
    %91 = vmatpush1.msra.mxu0 %v49
    %92 = vmatprep.subr.mxu0 0.0
    %93 = vmatpush1.msra.mxu0 %v48
    %94 = vmatprep.subr.mxu0 0.0
    %95 = vmatpush1.msra.mxu0 %v47
    %96 = vmatprep.subr.mxu0 0.0
    %97 = vmatpush1.msra.mxu0 %v46
    %98 = vmatprep.subr.mxu0 0.0
    %99 = vmatpush1.msra.mxu0 %v45
    %100 = vmatprep.subr.mxu0 0.0
    %101 = vmatpush2.msra.mxu0 0.0
    %102 = vmatprep.subr.mxu0 0.0
    %103 = vmatpush2.msra.mxu0 0.0
    %104 = vmatprep.subr.mxu0 0.0
    %105 = vmatpush2.msra.mxu0 0.0
    %106 = vmatprep.subr.mxu0 0.0
    %107 = vmatpush2.msra.mxu0 0.0
    %108 = vmatprep.subr.mxu0 0.0
    %109 = vmatpush2.msra.mxu0 0.0
    %110 = vmatprep.subr.mxu0 0.0
    %111 = vmatpush2.msra.mxu0 0.0
    %112 = vmatprep.subr.mxu0 0.0
    %113 = vmatpush2.msra.mxu0 0.0
    %114 = vmatprep.subr.mxu0 0.0
    %115 = vmatpush2.msra.mxu0 0.0
    %116 = vmatprep.subr.mxu0 0.0
    %117 = vmatpush2.msra.mxu0 0.0
    %118 = vmatprep.subr.mxu0 0.0
    %119 = vmatpush2.msra.mxu0 0.0
    %120 = vmatprep.subr.mxu0 0.0
    %121 = vmatpush2.msra.mxu0 0.0
    %122 = vmatprep.subr.mxu0 0.0
    %123 = vmatpush2.msra.mxu0 0.0
    %124 = vmatprep.subr.mxu0 0.0
    %125 = vmatpush2.msra.mxu0 0.0
    %126 = vmatprep.subr.mxu0 0.0
    %127 = vmatpush2.msra.mxu0 0.0
    %128 = vmatprep.subr.mxu0 0.0
    %129 = vmatpush2.msra.mxu0 0.0
    %130 = vmatprep.subr.mxu0 0.0
    %131 = vmatpush2.msra.mxu0 0.0
    %132 = vmatprep.mubr.f32.mxu0 0.0
    %133 = vmatmul.mubr.f32.gmra.mxu0 %v43
    %v134 = vpop.f32.mrf.mxu0
    %v135 = vadd.f32 %v66, %v134
    %v136 = vpop.f32.mrf.mxu0
    %137 = vmatprep.mubr.f32.mxu0 0.0
    %138 = vmatmul.mubr.f32.gmra.mxu0 %v44
    %v139 = vpop.f32.mrf.mxu0
    %v140 = vadd.f32 %v66, %v139
    %v141 = vpop.f32.mrf.mxu0
    %142 = vdwg.mxu0
    %143 = vst [vmem:[#allocation7] sm:$0xff] %v135
    %144 = vst [vmem:[#allocation7 + $0x8] sm:$0xff] %v140
    // Predicated region
    $region22: #{tpu_custom_call.1} parent=1 // pred_check
      _
    $region23: #{tpu_custom_call.1} parent=1 // pred_check_branch
      %146 = sbr.rel (0) target = $region25
    $region24: #{tpu_custom_call.1} parent=1 // pred_region
      %s148 = ssub.s32 256, 256
      %149 = vsyncadd [#allocation4], %s148
      %s150 = sshll.u32 [#allocation7], 4
      %s151 = int_to_ptr.vmem [resolvable:$true] %s150
      %156 = dma.vmem_to_hbm [thread:$0]  %s151, 256, %s3, [#allocation4], 128, 128, 8
    $region25: #{tpu_custom_call.1} parent=1 // pred_fallthru
      _
    // Predicated region
    $region26: #{tpu_custom_call.1} parent=1 // pred_check
      _
    $region27: #{tpu_custom_call.1} parent=1 // pred_check_branch
      %158 = sbr.rel (0) target = $region29
    $region28: #{tpu_custom_call.1} parent=1 // pred_region
      %159 = dma.done [#allocation4], 256
    $region29: #{tpu_custom_call.1} parent=1 // pred_fallthru
      _
    %160 = vsyncpa [#allocation3], 1
    %161 = vsyncpa [#allocation6], 1
    %162 = vsyncpa [#allocation4], 1

</llo_original>
